<compile_context>
chip_gen: v7x
topology: tpu7x:2x2x1
jax: 0.10.0
libtpu: 0.0.40
codegen_flags: <defaults>
</compile_context>

<pallas_src>
import jax
import jax.numpy as jnp
from jax.experimental import pallas as pl
from jax.experimental.pallas import tpu as pltpu


def _round_up(x, m):
    return (x + m - 1) // m * m


def _value_net_kernel(x_ref, w1_ref, b1_ref, w2_ref, b2_ref, w3_ref, b3_ref,
                      out_ref):
    x = x_ref[...]
    # linear1 + relu (MXU matmul, f32 accumulate; bias/relu on VPU in f32)
    h1 = jnp.dot(x, w1_ref[...], preferred_element_type=jnp.float32)
    h1 = jnp.maximum(h1 + b1_ref[...], 0.0)
    # linear2 + relu
    h2 = jnp.dot(h1, w2_ref[...], preferred_element_type=jnp.float32)
    h2 = jnp.maximum(h2 + b2_ref[...], 0.0)
    # linear3 (out_features=1): VPU multiply + lane reduction instead of a
    # single-output-lane MXU matmul.  w3_ref is [1, hidden] and broadcasts.
    out = jnp.sum(h2 * w3_ref[...], axis=-1, keepdims=True) + b3_ref[0, 0]
    out_ref[...] = out.astype(out_ref.dtype)


def value_network_forward(x, params, *, block_b=256):
    """x: [B, num_inputs] float32 -> [B, 1] float32."""
    w1, b1, w2, b2, w3, b3 = params
    B, num_inputs = x.shape

    # Batch tile: multiple of 8 (f32 sublane), capped at block_b.  Pad B so
    # the grid divides evenly; padded rows are discarded after the call.
    tb = min(block_b, _round_up(B, 8))
    b_pad = _round_up(B, tb)
    if b_pad != B:
        x = jnp.pad(x, ((0, b_pad - B), (0, 0)))
    grid = (b_pad // tb,)

    # Weights/biases: constant block index -> stay resident in VMEM across
    # all grid iterations (only x/out are pipelined).
    def const_spec(a):
        nd = a.ndim
        return pl.BlockSpec(a.shape, lambda i, _nd=nd: (0,) * _nd)

    out = pl.pallas_call(
        _value_net_kernel,
        out_shape=jax.ShapeDtypeStruct((b_pad, 1), jnp.float32),
        grid=grid,
        in_specs=[
            pl.BlockSpec((tb, num_inputs), lambda i: (i, 0)),   # x: pipelined
            const_spec(w1),
            const_spec(b1),
            const_spec(w2),
            const_spec(b2),
            const_spec(w3),
            # b3 is a single scalar -> SMEM, added on the scalar path.
            pl.BlockSpec(b3.shape, lambda i: (0, 0),
                         memory_space=pltpu.MemorySpace.SMEM),
        ],
        out_specs=pl.BlockSpec((tb, 1), lambda i: (i, 0)),
        compiler_params=pltpu.CompilerParams(
            dimension_semantics=("parallel",)),
    )(x, w1, b1, w2, b2, w3, b3)
    return out[:B]


def init_value_network_params(key, num_inputs, hidden_size, init_w=0.003):
    """Deterministic init mirroring PyTorch defaults.

    linear1/linear2: default nn.Linear init -> U(-1/sqrt(fan_in), 1/sqrt(fan_in)).
    linear3: explicit U(-init_w, init_w) for weight and bias.
    w1/w2 stored [in, out] (transposed vs. PyTorch) for x @ W;
    w3 stored [1, hidden] (PyTorch layout) for the broadcast-reduce;
    b3 stored [1, 1] and passed through SMEM.
    """
    k1, k2, k3, k4, k5, k6 = jax.random.split(key, 6)
    bound1 = 1.0 / jnp.sqrt(num_inputs)
    bound2 = 1.0 / jnp.sqrt(hidden_size)
    w1 = jax.random.uniform(k1, (num_inputs, hidden_size), jnp.float32,
                            -bound1, bound1)
    b1 = jax.random.uniform(k2, (1, hidden_size), jnp.float32, -bound1, bound1)
    w2 = jax.random.uniform(k3, (hidden_size, hidden_size), jnp.float32,
                            -bound2, bound2)
    b2 = jax.random.uniform(k4, (1, hidden_size), jnp.float32, -bound2, bound2)
    w3 = jax.random.uniform(k5, (1, hidden_size), jnp.float32, -init_w, init_w)
    b3 = jax.random.uniform(k6, (1, 1), jnp.float32, -init_w, init_w)
    return (w1, b1, w2, b2, w3, b3)


def _reference_forward(x, params):
    w1, b1, w2, b2, w3, b3 = params
    h1 = jnp.maximum(x @ w1 + b1, 0.0)
    h2 = jnp.maximum(h1 @ w2 + b2, 0.0)
    return h2 @ w3.T + b3


if __name__ == "__main__":
    num_inputs = 16
    hidden_size = 32

    key = jax.random.PRNGKey(0)
    kx, kp, kx2 = jax.random.split(key, 3)
    params = init_value_network_params(kp, num_inputs, hidden_size)

    # Small batch (single grid step, padded to the 8-row sublane multiple).
    batch = 8
    x = jax.random.normal(kx, (batch, num_inputs), dtype=jnp.float32)
    out = jax.block_until_ready(value_network_forward(x, params))
    ref = _reference_forward(x, params)
    assert out.shape == (batch, 1), out.shape
    assert jnp.allclose(out, ref, atol=1e-5, rtol=1e-5), "mismatch vs reference (B=8)"

    # Ragged batch exercising the pipelined batch grid (grid of 2 tiles) and
    # tail padding.
    batch2 = 100
    x2 = jax.random.normal(kx2, (batch2, num_inputs), dtype=jnp.float32)
    out2 = jax.block_until_ready(value_network_forward(x2, params, block_b=64))
    ref2 = _reference_forward(x2, params)
    assert out2.shape == (batch2, 1), out2.shape
    assert jnp.allclose(out2, ref2, atol=1e-5, rtol=1e-5), "mismatch vs reference (B=100)"

    print("KERNEL_OK")
</pallas_src>

<mosaic_0001>
module attributes {stable_mosaic.version = 11 : i64} {
  func.func @_value_net_kernel(%arg0: i32, %arg1: memref<8x16xf32, #tpu.memory_space<vmem>>, %arg2: memref<16x32xf32, #tpu.memory_space<vmem>>, %arg3: memref<1x32xf32, #tpu.memory_space<vmem>>, %arg4: memref<32x32xf32, #tpu.memory_space<vmem>>, %arg5: memref<1x32xf32, #tpu.memory_space<vmem>>, %arg6: memref<1x32xf32, #tpu.memory_space<vmem>>, %arg7: memref<1x1xf32, #tpu.memory_space<smem>>, %arg8: memref<8x1xf32, #tpu.memory_space<vmem>>) attributes {dimension_semantics = [#tpu.dimension_semantics<parallel>], iteration_bounds = array<i64: 1>, scalar_prefetch = 0 : i64, scratch_operands = 0 : i64, tpu.core_type = #tpu.core_type<tc>, window_params = [{transform_indices = @transform_0, window_bounds = array<i64: 8, 16>}, {pipeline_mode = #tpu.pipeline_mode<synchronous>, transform_indices = @transform_1, window_bounds = array<i64: 16, 32>}, {pipeline_mode = #tpu.pipeline_mode<synchronous>, transform_indices = @transform_2, window_bounds = array<i64: 1, 32>}, {pipeline_mode = #tpu.pipeline_mode<synchronous>, transform_indices = @transform_3, window_bounds = array<i64: 32, 32>}, {pipeline_mode = #tpu.pipeline_mode<synchronous>, transform_indices = @transform_4, window_bounds = array<i64: 1, 32>}, {pipeline_mode = #tpu.pipeline_mode<synchronous>, transform_indices = @transform_5, window_bounds = array<i64: 1, 32>}, {transform_indices = @transform_6, window_bounds = array<i64: 1, 1>}, {transform_indices = @transform_7, window_bounds = array<i64: 8, 1>}]} {
    %c0 = arith.constant 0 : index
    %c0_0 = arith.constant 0 : index
    %0 = vector.load %arg1[%c0, %c0_0] : memref<8x16xf32, #tpu.memory_space<vmem>>, vector<8x16xf32>
    %c0_1 = arith.constant 0 : index
    %c0_2 = arith.constant 0 : index
    %1 = vector.load %arg2[%c0_1, %c0_2] : memref<16x32xf32, #tpu.memory_space<vmem>>, vector<16x32xf32>
    %cst = arith.constant dense<0.000000e+00> : vector<8x32xf32>
    %2 = tpu.matmul %0, %1, %cst {dimension_numbers = #tpu.dot_dimension_numbers<[1], [0], [0], [1], [0, 0, 1, 1], [], []>} : vector<8x16xf32>, vector<16x32xf32>, vector<8x32xf32> -> vector<8x32xf32>
    %c0_3 = arith.constant 0 : index
    %c0_4 = arith.constant 0 : index
    %3 = vector.load %arg3[%c0_3, %c0_4] : memref<1x32xf32, #tpu.memory_space<vmem>>, vector<1x32xf32>
    %4 = vector.broadcast %3 : vector<1x32xf32> to vector<8x32xf32>
    %5 = arith.addf %2, %4 : vector<8x32xf32>
    %cst_5 = arith.constant 0.000000e+00 : f32
    %6 = vector.broadcast %cst_5 : f32 to vector<8x32xf32>
    %7 = arith.maximumf %5, %6 : vector<8x32xf32>
    %c0_6 = arith.constant 0 : index
    %c0_7 = arith.constant 0 : index
    %8 = vector.load %arg4[%c0_6, %c0_7] : memref<32x32xf32, #tpu.memory_space<vmem>>, vector<32x32xf32>
    %cst_8 = arith.constant dense<0.000000e+00> : vector<8x32xf32>
    %9 = tpu.matmul %7, %8, %cst_8 {dimension_numbers = #tpu.dot_dimension_numbers<[1], [0], [0], [1], [0, 0, 1, 1], [], []>} : vector<8x32xf32>, vector<32x32xf32>, vector<8x32xf32> -> vector<8x32xf32>
    %c0_9 = arith.constant 0 : index
    %c0_10 = arith.constant 0 : index
    %10 = vector.load %arg5[%c0_9, %c0_10] : memref<1x32xf32, #tpu.memory_space<vmem>>, vector<1x32xf32>
    %11 = vector.broadcast %10 : vector<1x32xf32> to vector<8x32xf32>
    %12 = arith.addf %9, %11 : vector<8x32xf32>
    %cst_11 = arith.constant 0.000000e+00 : f32
    %13 = vector.broadcast %cst_11 : f32 to vector<8x32xf32>
    %14 = arith.maximumf %12, %13 : vector<8x32xf32>
    %c0_12 = arith.constant 0 : index
    %c0_13 = arith.constant 0 : index
    %15 = vector.load %arg6[%c0_12, %c0_13] : memref<1x32xf32, #tpu.memory_space<vmem>>, vector<1x32xf32>
    %16 = vector.broadcast %15 : vector<1x32xf32> to vector<8x32xf32>
    %17 = arith.mulf %14, %16 : vector<8x32xf32>
    %cst_14 = arith.constant dense<0.000000e+00> : vector<8xf32>
    %18 = vector.multi_reduction <add>, %17, %cst_14 [1] : vector<8x32xf32> to vector<8xf32>
    %19 = vector.shape_cast %18 : vector<8xf32> to vector<8x1xf32>
    %c0_15 = arith.constant 0 : index
    %c0_16 = arith.constant 0 : index
    %20 = memref.load %arg7[%c0_15, %c0_16] : memref<1x1xf32, #tpu.memory_space<smem>>
    %21 = vector.broadcast %20 : f32 to vector<8x1xf32>
    %22 = arith.addf %19, %21 : vector<8x1xf32>
    %c0_17 = arith.constant 0 : index
    %c0_18 = arith.constant 0 : index
    %23 = vector.load %arg8[%c0_17, %c0_18] : memref<8x1xf32, #tpu.memory_space<vmem>>, vector<8x1xf32>
    tpu.vector_store %arg8[%c0_17, %c0_18], %22 {strides = array<i32>} : memref<8x1xf32, #tpu.memory_space<vmem>>, vector<8x1xf32>,
    return
  }
  func.func @transform_0(%arg0: i32) -> (i32, i32) {
    %c0_i32 = arith.constant 0 : i32
    %c0_i32_0 = arith.constant 0 : i32
    return %arg0, %c0_i32 : i32, i32
  }
  func.func @transform_1(%arg0: i32) -> (i32, i32) {
    %c0_i32 = arith.constant 0 : i32
    %c0_i32_0 = arith.constant 0 : i32
    %c0_i32_1 = arith.constant 0 : i32
    return %c0_i32, %c0_i32_0 : i32, i32
  }
  func.func @transform_2(%arg0: i32) -> (i32, i32) {
    %c0_i32 = arith.constant 0 : i32
    %c0_i32_0 = arith.constant 0 : i32
    %c0_i32_1 = arith.constant 0 : i32
    return %c0_i32, %c0_i32_0 : i32, i32
  }
  func.func @transform_3(%arg0: i32) -> (i32, i32) {
    %c0_i32 = arith.constant 0 : i32
    %c0_i32_0 = arith.constant 0 : i32
    %c0_i32_1 = arith.constant 0 : i32
    return %c0_i32, %c0_i32_0 : i32, i32
  }
  func.func @transform_4(%arg0: i32) -> (i32, i32) {
    %c0_i32 = arith.constant 0 : i32
    %c0_i32_0 = arith.constant 0 : i32
    %c0_i32_1 = arith.constant 0 : i32
    return %c0_i32, %c0_i32_0 : i32, i32
  }
  func.func @transform_5(%arg0: i32) -> (i32, i32) {
    %c0_i32 = arith.constant 0 : i32
    %c0_i32_0 = arith.constant 0 : i32
    %c0_i32_1 = arith.constant 0 : i32
    return %c0_i32, %c0_i32_0 : i32, i32
  }
  func.func @transform_6(%arg0: i32) -> (i32, i32) {
    %c0_i32 = arith.constant 0 : i32
    %c0_i32_0 = arith.constant 0 : i32
    %c0_i32_1 = arith.constant 0 : i32
    return %c0_i32, %c0_i32_0 : i32, i32
  }
  func.func @transform_7(%arg0: i32) -> (i32, i32) {
    %c0_i32 = arith.constant 0 : i32
    %c0_i32_0 = arith.constant 0 : i32
    return %arg0, %c0_i32 : i32, i32
  }
}

</mosaic_0001>

<llo_original>
// kernel: tpu_custom_call.1
$region0: #{tpu_custom_call.1}
  #allocation0 [shape = 'u32[]', space=smem, size = 0x4, offset = 0x4, fixed_abs, tag = 'smem constant byte address 0x4 - core index']
  #allocation1 [shape = 'u32[144,128]{1,0:T(1,128)}', space=vmem, size = 0x12000, scoped, tag = 'internal scratch']
  #allocation2 [shape = 'f32[1,1]{1,0:T(1,128)S(6)}', space=smem, size = 0x200, scoped, tag = 'scoped memory for tpu_custom_call.1']
  %s0 = inlined_call_operand.hbm [shape: f32[8,16], index: 0, kind: input, shape index: {}]
  %s1 = inlined_call_operand.hbm [shape: f32[16,32], index: 1, kind: input, shape index: {}]
  %s2 = inlined_call_operand.vmem [shape: f32[1,32], index: 2, kind: input, shape index: {}]
  %s3 = inlined_call_operand.hbm [shape: f32[32,32], index: 3, kind: input, shape index: {}]
  %s4 = inlined_call_operand.vmem [shape: f32[1,32], index: 4, kind: input, shape index: {}]
  %s5 = inlined_call_operand.vmem [shape: f32[1,32], index: 5, kind: input, shape index: {}]
  %s6 = inlined_call_operand.<no memory space> [shape: f32[1,1], index: 6, kind: input, shape index: {}]
  %s7 = inlined_call_operand.vmem [shape: f32[8,1], index: 7, kind: output, shape index: {}]
  %s8 = sld [smem:[#allocation0]]
  $region50: #{tpu_custom_call.1} parent=0
    _
  %s10 = ssub.s32 1, %s8
  %s11 = scalar_select 0, %s10, %s8
  %12 = sst [smem:[#allocation2]] %s6
  $region1: #{tpu_custom_call.1} parent=0
    #allocation3 [shape = 'u8[4096]{0}', space=vmem, size = 0x1000, scoped, tag = 'input window, operand 0, single buffered']
    #allocation4 [shape = 's32[1]{0}', space=sflag, size = 0x4, scoped, tag = 'scoped memory for tpu_custom_call.1']
    #allocation5 [shape = 'u8[8192]{0}', space=vmem, size = 0x2000, scoped, tag = 'input window, operand 1, single buffered']
    #allocation6 [shape = 's32[1]{0}', space=sflag, size = 0x4, scoped, tag = 'scoped memory for tpu_custom_call.1']
    #allocation7 [shape = 'u8[16384]{0}', space=vmem, size = 0x4000, scoped, tag = 'input window, operand 3, single buffered']
    %13 = vsyncpa [#allocation4], 0
    %14 = vsyncpa [#allocation6], 0
    // Predicated region
    $region2: #{tpu_custom_call.1} parent=1 // pred_check
      _
    $region3: #{tpu_custom_call.1} parent=1 // pred_check_branch
      %16 = sbr.rel (0) target = $region5
    $region4: #{tpu_custom_call.1} parent=1 // pred_region
      %s18 = ssub.s32 128, 128
      %19 = vsyncadd [#allocation4], %s18
      %s21 = sshll.u32 [#allocation3], 4
      %s22 = int_to_ptr.vmem [resolvable:$true] %s21
      %24 = dma.hbm_to_vmem [thread:$0]  %s0, 128, %s22, [#allocation4]
    $region5: #{tpu_custom_call.1} parent=1 // pred_fallthru
      _
    // Predicated region
    $region6: #{tpu_custom_call.1} parent=1 // pred_check
      _
    $region7: #{tpu_custom_call.1} parent=1 // pred_check_branch
      %26 = sbr.rel (0) target = $region9
    $region8: #{tpu_custom_call.1} parent=1 // pred_region
      %s28 = ssub.s32 256, 256
      %29 = vsyncadd [#allocation6], %s28
      %s30 = sshll.u32 [#allocation5], 4
      %s31 = int_to_ptr.vmem [resolvable:$true] %s30
      %36 = dma.hbm_to_vmem [thread:$0]  %s1, 256, %s31, [#allocation6], 128, 128, 8
    $region9: #{tpu_custom_call.1} parent=1 // pred_fallthru
      _
    // Predicated region
    $region10: #{tpu_custom_call.1} parent=1 // pred_check
      _
    $region11: #{tpu_custom_call.1} parent=1 // pred_check_branch
      %38 = sbr.rel (0) target = $region13
    $region12: #{tpu_custom_call.1} parent=1 // pred_region
      _
    $region13: #{tpu_custom_call.1} parent=1 // pred_fallthru
      _
    // Predicated region
    $region14: #{tpu_custom_call.1} parent=1 // pred_check
      _
    $region15: #{tpu_custom_call.1} parent=1 // pred_check_branch
      %40 = sbr.rel (0) target = $region17
    $region16: #{tpu_custom_call.1} parent=1 // pred_region
      %s42 = ssub.s32 512, 512
      %43 = vsyncadd [#allocation6], %s42
      %s44 = sshll.u32 [#allocation7], 4
      %s45 = int_to_ptr.vmem [resolvable:$true] %s44
      %50 = dma.hbm_to_vmem [thread:$0]  %s3, 512, %s45, [#allocation6], 128, 128, 8
    $region17: #{tpu_custom_call.1} parent=1 // pred_fallthru
      _
    // Predicated region
    $region18: #{tpu_custom_call.1} parent=1 // pred_check
      _
    $region19: #{tpu_custom_call.1} parent=1 // pred_check_branch
      %52 = sbr.rel (0) target = $region21
    $region20: #{tpu_custom_call.1} parent=1 // pred_region
      _
    $region21: #{tpu_custom_call.1} parent=1 // pred_fallthru
      _
    // Predicated region
    $region22: #{tpu_custom_call.1} parent=1 // pred_check
      _
    $region23: #{tpu_custom_call.1} parent=1 // pred_check_branch
      %54 = sbr.rel (0) target = $region25
    $region24: #{tpu_custom_call.1} parent=1 // pred_region
      _
    $region25: #{tpu_custom_call.1} parent=1 // pred_fallthru
      _
    // Predicated region
    $region26: #{tpu_custom_call.1} parent=1 // pred_check
      _
    $region27: #{tpu_custom_call.1} parent=1 // pred_check_branch
      %56 = sbr.rel (0) target = $region29
    $region28: #{tpu_custom_call.1} parent=1 // pred_region
      _
    $region29: #{tpu_custom_call.1} parent=1 // pred_fallthru
      _
    // Predicated region
    $region30: #{tpu_custom_call.1} parent=1 // pred_check
      _
    $region31: #{tpu_custom_call.1} parent=1 // pred_check_branch
      %58 = sbr.rel (0) target = $region33
    $region32: #{tpu_custom_call.1} parent=1 // pred_region
      %59 = dma.done [#allocation4], 128
    $region33: #{tpu_custom_call.1} parent=1 // pred_fallthru
      _
    // Predicated region
    $region34: #{tpu_custom_call.1} parent=1 // pred_check
      _
    $region35: #{tpu_custom_call.1} parent=1 // pred_check_branch
      %61 = sbr.rel (0) target = $region37
    $region36: #{tpu_custom_call.1} parent=1 // pred_region
      %62 = dma.done [#allocation6], 256
    $region37: #{tpu_custom_call.1} parent=1 // pred_fallthru
      _
    // Predicated region
    $region38: #{tpu_custom_call.1} parent=1 // pred_check
      _
    $region39: #{tpu_custom_call.1} parent=1 // pred_check_branch
      %64 = sbr.rel (0) target = $region41
    $region40: #{tpu_custom_call.1} parent=1 // pred_region
      %65 = dma.done [#allocation6], 512
    $region41: #{tpu_custom_call.1} parent=1 // pred_fallthru
      _
    %v66 = vld [vmem:[#allocation3] sm:$0xff]
    %v67 = vld [vmem:[#allocation5] sm:$0xff]
    %v68 = vld [vmem:[#allocation5 + $0x8] sm:$0xff]
    %v69 = vld [vmem:[%s2] sm:$0x1]
    %v71 = vlaneseq
    %v72 = vshrl.u32 %v71, 7
    %v73 = vsub.s32 0, %v72
    %v74 = vrot.slane %v69, %v73
    %vm76 = vcmask 130048
    %v78 = vsel %vm76, %v66, 0
    %80 = vmatprep.subr.mxu0 0.0
    %81 = vmatpush1.msra.mxu0 %v67
    %82 = vmatprep.subr.mxu0 0.0
    %83 = vmatpush1.msra.mxu0 %v68
    %84 = vmatprep.subr.mxu0 0.0
    %85 = vmatpush1.msra.mxu0 0.0
    %86 = vmatprep.subr.mxu0 0.0
    %87 = vmatpush1.msra.mxu0 0.0
    %88 = vmatprep.subr.mxu0 0.0
    %89 = vmatpush1.msra.mxu0 0.0
    %90 = vmatprep.subr.mxu0 0.0
    %91 = vmatpush1.msra.mxu0 0.0
    %92 = vmatprep.subr.mxu0 0.0
    %93 = vmatpush1.msra.mxu0 0.0
    %94 = vmatprep.subr.mxu0 0.0
    %95 = vmatpush1.msra.mxu0 0.0
    %96 = vmatprep.subr.mxu0 0.0
    %97 = vmatpush1.msra.mxu0 0.0
    %98 = vmatprep.subr.mxu0 0.0
    %99 = vmatpush1.msra.mxu0 0.0
    %100 = vmatprep.subr.mxu0 0.0
    %101 = vmatpush1.msra.mxu0 0.0
    %102 = vmatprep.subr.mxu0 0.0
    %103 = vmatpush1.msra.mxu0 0.0
    %104 = vmatprep.subr.mxu0 0.0
    %105 = vmatpush1.msra.mxu0 0.0
    %106 = vmatprep.subr.mxu0 0.0
    %107 = vmatpush1.msra.mxu0 0.0
    %108 = vmatprep.subr.mxu0 0.0
    %109 = vmatpush1.msra.mxu0 0.0
    %110 = vmatprep.subr.mxu0 0.0
    %111 = vmatpush1.msra.mxu0 0.0
    %112 = vmatprep.subr.mxu0 0.0
    %113 = vmatpush1.msra.mxu0 0.0
    %114 = vmatprep.subr.mxu0 0.0
    %115 = vmatpush1.msra.mxu0 0.0
    %116 = vmatprep.subr.mxu0 0.0
    %117 = vmatpush1.msra.mxu0 0.0
    %118 = vmatprep.subr.mxu0 0.0
    %119 = vmatpush1.msra.mxu0 0.0
    %120 = vmatprep.subr.mxu0 0.0
    %121 = vmatpush1.msra.mxu0 0.0
    %122 = vmatprep.subr.mxu0 0.0
    %123 = vmatpush1.msra.mxu0 0.0
    %124 = vmatprep.subr.mxu0 0.0
    %125 = vmatpush1.msra.mxu0 0.0
    %126 = vmatprep.subr.mxu0 0.0
    %127 = vmatpush1.msra.mxu0 0.0
    %128 = vmatprep.subr.mxu0 0.0
    %129 = vmatpush1.msra.mxu0 0.0
    %130 = vmatprep.subr.mxu0 0.0
    %131 = vmatpush1.msra.mxu0 0.0
    %132 = vmatprep.subr.mxu0 0.0
    %133 = vmatpush1.msra.mxu0 0.0
    %134 = vmatprep.subr.mxu0 0.0
    %135 = vmatpush1.msra.mxu0 0.0
    %136 = vmatprep.subr.mxu0 0.0
    %137 = vmatpush1.msra.mxu0 0.0
    %138 = vmatprep.subr.mxu0 0.0
    %139 = vmatpush1.msra.mxu0 0.0
    %140 = vmatprep.subr.mxu0 0.0
    %141 = vmatpush1.msra.mxu0 0.0
    %142 = vmatprep.subr.mxu0 0.0
    %143 = vmatpush1.msra.mxu0 0.0
    %144 = vmatprep.mubr.f32.mxu0 0.0
    %145 = vmatmul.mubr.f32.gmra.mrb[0].mxu0 %v78
    %v146 = vpop.f32.mrb[0].mxu0
    %v147 = vadd.f32 %v74, %v146
    %v148 = vpop.f32.mrb[0].mxu0
    %149 = vdwg.mxu0
    %v150 = vmax.f32 %v147, 0.0
    %v151 = vld [vmem:[#allocation7] sm:$0xff]
    %v152 = vld [vmem:[#allocation7 + $0x8] sm:$0xff]
    %v153 = vld [vmem:[#allocation7 + $0x10] sm:$0xff]
    %v154 = vld [vmem:[#allocation7 + $0x18] sm:$0xff]
    %v155 = vld [vmem:[%s4] sm:$0x1]
    %v157 = vlaneseq
    %v158 = vshrl.u32 %v157, 7
    %v159 = vsub.s32 0, %v158
    %v160 = vrot.slane %v155, %v159
    %vm162 = vcmask 261120
    %v164 = vsel %vm162, %v150, 0
    %166 = vmatprep.subr.mxu0 0.0
    %167 = vmatpush1.msra.mxu0 %v151
    %168 = vmatprep.subr.mxu0 0.0
    %169 = vmatpush1.msra.mxu0 %v152
    %170 = vmatprep.subr.mxu0 0.0
    %171 = vmatpush1.msra.mxu0 %v153
    %172 = vmatprep.subr.mxu0 0.0
    %173 = vmatpush1.msra.mxu0 %v154
    %174 = vmatprep.subr.mxu0 0.0
    %175 = vmatpush1.msra.mxu0 0.0
    %176 = vmatprep.subr.mxu0 0.0
    %177 = vmatpush1.msra.mxu0 0.0
    %178 = vmatprep.subr.mxu0 0.0
    %179 = vmatpush1.msra.mxu0 0.0
    %180 = vmatprep.subr.mxu0 0.0
    %181 = vmatpush1.msra.mxu0 0.0
    %182 = vmatprep.subr.mxu0 0.0
    %183 = vmatpush1.msra.mxu0 0.0
    %184 = vmatprep.subr.mxu0 0.0
    %185 = vmatpush1.msra.mxu0 0.0
    %186 = vmatprep.subr.mxu0 0.0
    %187 = vmatpush1.msra.mxu0 0.0
    %188 = vmatprep.subr.mxu0 0.0
    %189 = vmatpush1.msra.mxu0 0.0
    %190 = vmatprep.subr.mxu0 0.0
    %191 = vmatpush1.msra.mxu0 0.0
    %192 = vmatprep.subr.mxu0 0.0
    %193 = vmatpush1.msra.mxu0 0.0
    %194 = vmatprep.subr.mxu0 0.0
    %195 = vmatpush1.msra.mxu0 0.0
    %196 = vmatprep.subr.mxu0 0.0
    %197 = vmatpush1.msra.mxu0 0.0
    %198 = vmatprep.subr.mxu0 0.0
    %199 = vmatpush1.msra.mxu0 0.0
    %200 = vmatprep.subr.mxu0 0.0
    %201 = vmatpush1.msra.mxu0 0.0
    %202 = vmatprep.subr.mxu0 0.0
    %203 = vmatpush1.msra.mxu0 0.0
    %204 = vmatprep.subr.mxu0 0.0
    %205 = vmatpush1.msra.mxu0 0.0
    %206 = vmatprep.subr.mxu0 0.0
    %207 = vmatpush1.msra.mxu0 0.0
    %208 = vmatprep.subr.mxu0 0.0
    %209 = vmatpush1.msra.mxu0 0.0
    %210 = vmatprep.subr.mxu0 0.0
    %211 = vmatpush1.msra.mxu0 0.0
    %212 = vmatprep.subr.mxu0 0.0
    %213 = vmatpush1.msra.mxu0 0.0
    %214 = vmatprep.subr.mxu0 0.0
    %215 = vmatpush1.msra.mxu0 0.0
    %216 = vmatprep.subr.mxu0 0.0
    %217 = vmatpush1.msra.mxu0 0.0
    %218 = vmatprep.subr.mxu0 0.0
    %219 = vmatpush1.msra.mxu0 0.0
    %220 = vmatprep.subr.mxu0 0.0
    %221 = vmatpush1.msra.mxu0 0.0
    %222 = vmatprep.subr.mxu0 0.0
    %223 = vmatpush1.msra.mxu0 0.0
    %224 = vmatprep.subr.mxu0 0.0
    %225 = vmatpush1.msra.mxu0 0.0
    %226 = vmatprep.subr.mxu0 0.0
    %227 = vmatpush1.msra.mxu0 0.0
    %228 = vmatprep.subr.mxu0 0.0
    %229 = vmatpush1.msra.mxu0 0.0
    %230 = vmatprep.mubr.f32.mxu0 0.0
    %231 = vmatmul.mubr.f32.gmra.mrb[0].mxu0 %v164
    %v232 = vpop.f32.mrb[0].mxu0
    %v233 = vadd.f32 %v160, %v232
    %v234 = vpop.f32.mrb[0].mxu0
    %235 = vdwg.mxu0
    %v236 = vmax.f32 %v233, 0.0
    %v237 = vld [vmem:[%s5] sm:$0x1]
    %v239 = vlaneseq
    %v240 = vshrl.u32 %v239, 7
    %v241 = vsub.s32 0, %v240
    %v242 = vrot.slane %v237, %v241
    %v244 = vmul.f32 %v236, %v242
    %v245 = vsel %vm162, %v244, 0.0
    %246 = vadd.xlane.f32.xlu0 %v245
    %v247 = vpop.xlane.xlu0 %246
    %s248 = sld [smem:[#allocation2]]
    %v249 = vstv %s248
    %v250 = vadd.f32 %v247, %v249
    %vm251 = vcmask 7168
    %252 = vst.msk [vmem:[%s7] sm:$0xff] %vm251, %v250
    // Predicated region
    $region42: #{tpu_custom_call.1} parent=1 // pred_check
      _
    $region43: #{tpu_custom_call.1} parent=1 // pred_check_branch
      %254 = sbr.rel (0) target = $region45
    $region44: #{tpu_custom_call.1} parent=1 // pred_region
      _
    $region45: #{tpu_custom_call.1} parent=1 // pred_fallthru
      _
    // Predicated region
    $region46: #{tpu_custom_call.1} parent=1 // pred_check
      _
    $region47: #{tpu_custom_call.1} parent=1 // pred_check_branch
      %256 = sbr.rel (0) target = $region49
    $region48: #{tpu_custom_call.1} parent=1 // pred_region
      _
    $region49: #{tpu_custom_call.1} parent=1 // pred_fallthru
      _
    %257 = vsyncpa [#allocation4], 1
    %258 = vsyncpa [#allocation6], 1

</llo_original>
